<compile_context>
chip_gen: v7x
topology: tpu7x:2x2x1
jax: 0.10.0
libtpu: 0.0.40
codegen_flags: <defaults>
</compile_context>

<pallas_src>
import functools
import math

import jax
import jax.numpy as jnp
from jax.experimental import pallas as pl
from jax.experimental.pallas import tpu as pltpu

LANES = 128
SUBLANES = 8


def _rfl_kernel(x_ref, t_ref, o_ref, *, gamma, neg_log_th, inv_th_gamma,
                reduce_axis):
    """Accumulate sum(loss * fr) over streamed (tr, 128) blocks (no masking)."""
    i = pl.program_id(reduce_axis)

    @pl.when(i == 0)
    def _():
        o_ref[...] = jnp.zeros_like(o_ref)

    x = x_ref[...].astype(jnp.float32)
    t = t_ref[...].astype(jnp.float32)

    # Numerically-stable binary_cross_entropy_with_logits (reduction='none'):
    #   loss = max(x, 0) - x*t + log1p(exp(-|x|))
    loss = jnp.maximum(x, 0.0) - x * t + jnp.log1p(jnp.exp(-jnp.abs(x)))

    # fr = where(pt < th, pt**g, (pt/th)**g) with pt = exp(-loss)
    #    = exp(-g*loss) * where(loss > -log(th), 1, th**(-g))
    fr = jnp.exp(-gamma * loss) * jnp.where(loss > neg_log_th, 1.0,
                                            inv_th_gamma)
    val = loss * fr  # alpha is applied once on the final scalar in the wrapper

    # Cross-vreg adds run on the VALU; the final 8->1 sublane reduce is a tiny
    # per-step XLU op (not per-vreg).  Accumulator is a resident (1,1,128)
    # lane-dense f32 output block.
    o_ref[...] += jnp.sum(val, axis=0, keepdims=True)[None]


def _rfl_sum_jnp(x, t, gamma, neg_log_th, inv_th_gamma):
    """Plain-jnp partial sum for the (tiny) non-tile-aligned remainder rows."""
    x = x.astype(jnp.float32)
    t = t.astype(jnp.float32)
    loss = jnp.maximum(x, 0.0) - x * t + jnp.log1p(jnp.exp(-jnp.abs(x)))
    fr = jnp.exp(-gamma * loss) * jnp.where(loss > neg_log_th, 1.0,
                                            inv_th_gamma)
    return jnp.sum(loss * fr)


def reduced_focal_loss(logits, targets, *, alpha=1.0, gamma=2.0, eps=1e-7,
                       threshold=0.5, block_rows=2048, num_cores=1):
    """Pallas implementation of ReducedFocalLoss(activation='sigmoid').

    `logits` / `targets` may be any matching shape (NCHW expected from the
    PyTorch caller) and any real dtype (bf16/f16 accepted directly; upcast
    happens inside the kernel).  Returns a float32 scalar (mean loss).

    num_cores: keep 1 on v5e/v6e (single TensorCore); pass 2 on v7x to split
    the streaming reduction across both TensorCores via CORE_PARALLEL.
    """
    del eps  # unused by the sigmoid forward path of the reference module
    assert logits.shape == targets.shape
    total = int(logits.size)
    gamma = float(gamma)
    alpha = float(alpha)
    neg_log_th = float(-math.log(threshold))
    inv_th_gamma = float(threshold ** (-gamma))

    xf = logits.reshape(-1)
    tf = targets.reshape(-1)

    rem = total % LANES
    if rem:
        # Only non-lane-aligned totals pay a pad copy.  Pad with benign values
        # (logit=+80, target=1 -> per-element contribution ~1e-35) so the
        # kernel needs no masking anywhere; the bias on the sum is negligible.
        pad = LANES - rem
        xf = jnp.pad(xf, (0, pad), constant_values=80.0)
        tf = jnp.pad(tf, (0, pad), constant_values=1.0)
    lane_rows = xf.size // LANES
    x2d = xf.reshape(lane_rows, LANES)   # zero-copy bitcast when rem == 0
    t2d = tf.reshape(lane_rows, LANES)

    # ---- tiling: full tr-row blocks go through the kernel; the remainder
    #      rows (< tr per core, <= ~1 MiB) are reduced with jnp in the wrapper.
    block_rows = max(SUBLANES, (int(block_rows) // SUBLANES) * SUBLANES)
    num_cores = max(1, int(num_cores))

    if num_cores > 1 and lane_rows >= num_cores * SUBLANES:
        rows_per_core = lane_rows // num_cores
        tr = min(block_rows, (rows_per_core // SUBLANES) * SUBLANES)
        blocks_per_core = lane_rows // (num_cores * tr)
        grid = (num_cores, blocks_per_core)
        semantics = (pltpu.CORE_PARALLEL, pltpu.ARBITRARY)
        in_map = lambda c, i: (c * blocks_per_core + i, 0)
        out_map = lambda c, i: (c, 0, 0)
        n_acc = num_cores
        reduce_axis = 1
        bulk_rows = num_cores * blocks_per_core * tr
    else:
        if lane_rows <= block_rows:
            tr = lane_rows          # block == full array dim (allowed)
            blocks = 1
        else:
            tr = block_rows         # multiple of 8
            blocks = lane_rows // tr
        grid = (blocks,)
        semantics = ("arbitrary",)
        in_map = lambda i: (i, 0)
        out_map = lambda i: (0, 0, 0)
        n_acc = 1
        reduce_axis = 0
        bulk_rows = blocks * tr

    kernel = functools.partial(
        _rfl_kernel,
        gamma=gamma,
        neg_log_th=neg_log_th,
        inv_th_gamma=inv_th_gamma,
        reduce_axis=reduce_axis,
    )

    partial_sum = jnp.float32(0.0)
    if bulk_rows > 0:
        partials = pl.pallas_call(
            kernel,
            out_shape=jax.ShapeDtypeStruct((n_acc, 1, LANES), jnp.float32),
            grid_spec=pltpu.PrefetchScalarGridSpec(
                num_scalar_prefetch=0,
                grid=grid,
                in_specs=[
                    pl.BlockSpec((tr, LANES), in_map),
                    pl.BlockSpec((tr, LANES), in_map),
                ],
                out_specs=pl.BlockSpec((1, 1, LANES), out_map),
            ),
            compiler_params=pltpu.CompilerParams(
                dimension_semantics=semantics,
                vmem_limit_bytes=32 * 1024 * 1024),
        )(x2d, t2d)
        partial_sum = partial_sum + jnp.sum(partials)

    if bulk_rows < lane_rows:
        # Tail rows not covered by the grid (strictly fewer than one block):
        # tiny, handled in plain XLA without any kernel-side masking.
        partial_sum = partial_sum + _rfl_sum_jnp(
            x2d[bulk_rows:], t2d[bulk_rows:], gamma, neg_log_th, inv_th_gamma)

    return (alpha * partial_sum) / jnp.float32(total)


def _reference(logits, targets, alpha=1.0, gamma=2.0, threshold=0.5):
    # Direct translation of the PyTorch forward (sigmoid branch).
    x = logits.astype(jnp.float32)
    t = targets.astype(jnp.float32)
    loss = jnp.maximum(x, 0.0) - x * t + jnp.log1p(jnp.exp(-jnp.abs(x)))
    pt = jnp.exp(-loss)
    fr = jnp.where(pt < threshold, pt ** gamma, (pt / threshold) ** gamma)
    return jnp.mean(alpha * loss * fr)


if __name__ == "__main__":
    key = jax.random.PRNGKey(0)
    k1, k2, k3, k4 = jax.random.split(key, 4)

    # NCHW inputs, as the PyTorch module would receive.
    N, C, H, W = 2, 4, 16, 16
    logits = jax.random.normal(k1, (N, C, H, W), dtype=jnp.float32)
    targets = (jax.random.uniform(k2, (N, C, H, W)) > 0.5).astype(jnp.float32)

    out = jax.block_until_ready(reduced_focal_loss(logits, targets))
    ref = _reference(logits, targets)
    assert jnp.allclose(out, ref, rtol=1e-5, atol=1e-6), (out, ref)

    # Ragged shape (total not a multiple of 128): exercises the benign-pad path.
    shape2 = (2, 3, 15, 17)
    logits2 = jax.random.normal(k3, shape2, dtype=jnp.float32)
    targets2 = (jax.random.uniform(k4, shape2) > 0.5).astype(jnp.float32)
    out2 = jax.block_until_ready(reduced_focal_loss(logits2, targets2))
    ref2 = _reference(logits2, targets2)
    assert jnp.allclose(out2, ref2, rtol=1e-5, atol=1e-6), (out2, ref2)

    # bf16 inputs go straight into the kernel (upcast happens in-kernel).
    out3 = jax.block_until_ready(
        reduced_focal_loss(logits.astype(jnp.bfloat16),
                           targets.astype(jnp.bfloat16)))
    ref3 = _reference(logits.astype(jnp.bfloat16), targets.astype(jnp.bfloat16))
    assert jnp.allclose(out3, ref3, rtol=1e-2, atol=1e-3), (out3, ref3)

    print("KERNEL_OK")
</pallas_src>

<mosaic_0001>
module attributes {stable_mosaic.version = 11 : i64} {
  func.func @_rfl_kernel(%arg0: i32, %arg1: memref<16x128xf32, #tpu.memory_space<vmem>>, %arg2: memref<16x128xf32, #tpu.memory_space<vmem>>, %arg3: memref<1x1x128xf32, #tpu.memory_space<vmem>>) attributes {dimension_semantics = [#tpu.dimension_semantics<arbitrary>], iteration_bounds = array<i64: 1>, scalar_prefetch = 0 : i64, scratch_operands = 0 : i64, tpu.core_type = #tpu.core_type<tc>, window_params = [{transform_indices = @transform_0, window_bounds = array<i64: 16, 128>}, {transform_indices = @transform_1, window_bounds = array<i64: 16, 128>}, {pipeline_mode = #tpu.pipeline_mode<synchronous>, transform_indices = @transform_2, window_bounds = array<i64: 1, 1, 128>}]} {
    %c0_i32 = arith.constant 0 : i32
    %0 = arith.cmpi eq, %arg0, %c0_i32 : i32
    %1 = arith.extui %0 : i1 to i32
    %c0_i32_0 = arith.constant 0 : i32
    %2 = arith.cmpi ne, %1, %c0_i32_0 : i32
    scf.if %2 {
      %cst_16 = arith.constant 0.000000e+00 : f32
      %31 = vector.broadcast %cst_16 : f32 to vector<1x1x128xf32>
      %c0_17 = arith.constant 0 : index
      %c0_18 = arith.constant 0 : index
      %c0_19 = arith.constant 0 : index
      %32 = vector.load %arg3[%c0_17, %c0_18, %c0_19] : memref<1x1x128xf32, #tpu.memory_space<vmem>>, vector<1x1x128xf32>
      tpu.vector_store %arg3[%c0_17, %c0_18, %c0_19], %31 {strides = array<i32>} : memref<1x1x128xf32, #tpu.memory_space<vmem>>, vector<1x1x128xf32>,
    } else {
    }
    %c0 = arith.constant 0 : index
    %c0_1 = arith.constant 0 : index
    %3 = vector.load %arg1[%c0, %c0_1] : memref<16x128xf32, #tpu.memory_space<vmem>>, vector<16x128xf32>
    %c0_2 = arith.constant 0 : index
    %c0_3 = arith.constant 0 : index
    %4 = vector.load %arg2[%c0_2, %c0_3] : memref<16x128xf32, #tpu.memory_space<vmem>>, vector<16x128xf32>
    %cst = arith.constant 0.000000e+00 : f32
    %5 = vector.broadcast %cst : f32 to vector<16x128xf32>
    %6 = arith.maximumf %3, %5 : vector<16x128xf32>
    %7 = arith.mulf %3, %4 : vector<16x128xf32>
    %8 = arith.subf %6, %7 : vector<16x128xf32>
    %9 = math.absf %3 : vector<16x128xf32>
    %cst_4 = arith.constant 0.000000e+00 : f32
    %10 = vector.broadcast %cst_4 : f32 to vector<16x128xf32>
    %11 = arith.subf %10, %9 : vector<16x128xf32>
    %12 = math.exp %11 : vector<16x128xf32>
    %13 = math.log1p %12 : vector<16x128xf32>
    %14 = arith.addf %8, %13 : vector<16x128xf32>
    %cst_5 = arith.constant -2.000000e+00 : f32
    %15 = vector.broadcast %cst_5 : f32 to vector<16x128xf32>
    %16 = arith.mulf %15, %14 : vector<16x128xf32>
    %17 = math.exp %16 : vector<16x128xf32>
    %cst_6 = arith.constant 0.693147182 : f32
    %18 = vector.broadcast %cst_6 : f32 to vector<16x128xf32>
    %19 = arith.cmpf ogt, %14, %18 : vector<16x128xf32>
    %cst_7 = arith.constant 1.000000e+00 : f32
    %cst_8 = arith.constant 4.000000e+00 : f32
    %20 = vector.broadcast %cst_7 : f32 to vector<16x128xf32>
    %21 = vector.broadcast %cst_8 : f32 to vector<16x128xf32>
    %22 = arith.select %19, %20, %21 : vector<16x128xi1>, vector<16x128xf32>
    %23 = arith.mulf %17, %22 : vector<16x128xf32>
    %24 = arith.mulf %14, %23 : vector<16x128xf32>
    %c0_9 = arith.constant 0 : index
    %c0_10 = arith.constant 0 : index
    %c0_11 = arith.constant 0 : index
    %25 = vector.load %arg3[%c0_9, %c0_10, %c0_11] : memref<1x1x128xf32, #tpu.memory_space<vmem>>, vector<1x1x128xf32>
    %cst_12 = arith.constant dense<0.000000e+00> : vector<128xf32>
    %26 = vector.multi_reduction <add>, %24, %cst_12 [0] : vector<16x128xf32> to vector<128xf32>
    %27 = vector.shape_cast %26 : vector<128xf32> to vector<1x128xf32>
    %28 = vector.shape_cast %27 : vector<1x128xf32> to vector<1x1x128xf32>
    %29 = arith.addf %25, %28 : vector<1x1x128xf32>
    %c0_13 = arith.constant 0 : index
    %c0_14 = arith.constant 0 : index
    %c0_15 = arith.constant 0 : index
    %30 = vector.load %arg3[%c0_13, %c0_14, %c0_15] : memref<1x1x128xf32, #tpu.memory_space<vmem>>, vector<1x1x128xf32>
    tpu.vector_store %arg3[%c0_13, %c0_14, %c0_15], %29 {strides = array<i32>} : memref<1x1x128xf32, #tpu.memory_space<vmem>>, vector<1x1x128xf32>,
    return
  }
  func.func @transform_0(%arg0: i32) -> (i32, i32) {
    %c0_i32 = arith.constant 0 : i32
    %c0_i32_0 = arith.constant 0 : i32
    return %arg0, %c0_i32 : i32, i32
  }
  func.func @transform_1(%arg0: i32) -> (i32, i32) {
    %c0_i32 = arith.constant 0 : i32
    %c0_i32_0 = arith.constant 0 : i32
    return %arg0, %c0_i32 : i32, i32
  }
  func.func @transform_2(%arg0: i32) -> (i32, i32, i32) {
    %c0_i32 = arith.constant 0 : i32
    %c0_i32_0 = arith.constant 0 : i32
    %c0_i32_1 = arith.constant 0 : i32
    %c0_i32_2 = arith.constant 0 : i32
    return %c0_i32, %c0_i32_0, %c0_i32_1 : i32, i32, i32
  }
}

</mosaic_0001>

<llo_original>
// kernel: tpu_custom_call.1
$region0: #{tpu_custom_call.1}
  #allocation0 [shape = 'u32[]', space=smem, size = 0x4, offset = 0x4, fixed_abs, tag = 'smem constant byte address 0x4 - core index']
  #allocation1 [shape = 'u32[144,128]{1,0:T(1,128)}', space=vmem, size = 0x12000, scoped, tag = 'internal scratch']
  %s0 = inlined_call_operand.hbm [shape: f32[16,128], index: 0, kind: input, shape index: {}]
  %s1 = inlined_call_operand.hbm [shape: f32[16,128], index: 1, kind: input, shape index: {}]
  %s2 = inlined_call_operand.hbm [shape: f32[1,1,128], index: 2, kind: output, shape index: {}]
  %s3 = sld [smem:[#allocation0]]
  $region30: #{tpu_custom_call.1} parent=0
    _
  %s5 = ssub.s32 1, %s3
  %s6 = scalar_select 0, %s5, %s3
  $region1: #{tpu_custom_call.1} parent=0
    #allocation2 [shape = 'u8[8192]{0}', space=vmem, size = 0x2000, scoped, tag = 'input window, operand 0, single buffered']
    #allocation3 [shape = 's32[1]{0}', space=sflag, size = 0x4, scoped, tag = 'scoped memory for tpu_custom_call.1']
    #allocation4 [shape = 's32[1]{0}', space=sflag, size = 0x4, scoped, tag = 'scoped memory for tpu_custom_call.1']
    #allocation5 [shape = 'u8[8192]{0}', space=vmem, size = 0x2000, scoped, tag = 'input window, operand 1, single buffered']
    #allocation6 [shape = 's32[1]{0}', space=sflag, size = 0x4, scoped, tag = 'scoped memory for tpu_custom_call.1']
    #allocation7 [shape = 'u8[512]{0}', space=vmem, size = 0x400, scoped, tag = 'output window, operand 0, single buffered']
    %7 = vsyncpa [#allocation3], 0
    %8 = vsyncpa [#allocation6], 0
    %9 = vsyncpa [#allocation4], 0
    // Predicated region
    $region2: #{tpu_custom_call.1} parent=1 // pred_check
      _
    $region3: #{tpu_custom_call.1} parent=1 // pred_check_branch
      %11 = sbr.rel (0) target = $region5
    $region4: #{tpu_custom_call.1} parent=1 // pred_region
      %s13 = ssub.s32 256, 256
      %14 = vsyncadd [#allocation3], %s13
      %s15 = sshll.u32 [#allocation2], 4
      %s16 = int_to_ptr.vmem [resolvable:$true] %s15
      %21 = dma.hbm_to_vmem [thread:$0]  %s0, 256, %s16, [#allocation3], 128, 128, 8
    $region5: #{tpu_custom_call.1} parent=1 // pred_fallthru
      _
    // Predicated region
    $region6: #{tpu_custom_call.1} parent=1 // pred_check
      _
    $region7: #{tpu_custom_call.1} parent=1 // pred_check_branch
      %23 = sbr.rel (0) target = $region9
    $region8: #{tpu_custom_call.1} parent=1 // pred_region
      %s25 = ssub.s32 256, 256
      %26 = vsyncadd [#allocation6], %s25
      %s27 = sshll.u32 [#allocation5], 4
      %s28 = int_to_ptr.vmem [resolvable:$true] %s27
      %33 = dma.hbm_to_vmem [thread:$0]  %s1, 256, %s28, [#allocation6], 128, 128, 8
    $region9: #{tpu_custom_call.1} parent=1 // pred_fallthru
      _
    // Predicated region
    $region10: #{tpu_custom_call.1} parent=1 // pred_check
      _
    $region11: #{tpu_custom_call.1} parent=1 // pred_check_branch
      %35 = sbr.rel (0) target = $region13
    $region12: #{tpu_custom_call.1} parent=1 // pred_region
      %36 = dma.done [#allocation3], 256
    $region13: #{tpu_custom_call.1} parent=1 // pred_fallthru
      _
    // Predicated region
    $region14: #{tpu_custom_call.1} parent=1 // pred_check
      _
    $region15: #{tpu_custom_call.1} parent=1 // pred_check_branch
      %38 = sbr.rel (0) target = $region17
    $region16: #{tpu_custom_call.1} parent=1 // pred_region
      %39 = dma.done [#allocation6], 256
    $region17: #{tpu_custom_call.1} parent=1 // pred_fallthru
      _
    %p40 = scmp.eq.s32.totalorder 0, 0
    // Predicated region
    $region18: #{tpu_custom_call.1} parent=1 // pred_check
      %p41 = pneg %p40
    $region19: #{tpu_custom_call.1} parent=1 // pred_check_branch
      %43 = sbr.rel (%p41) target = $region21
    $region20: #{tpu_custom_call.1} parent=1 // pred_region
      %44 = vst [vmem:[#allocation7] sm:$0x1] 0.0
    $region21: #{tpu_custom_call.1} parent=1 // pred_fallthru
      _
    %v45 = vld [vmem:[#allocation2] sm:$0xff]
    %v46 = vld [vmem:[#allocation2 + $0x8] sm:$0xff]
    %v47 = vld [vmem:[#allocation5] sm:$0xff]
    %v48 = vld [vmem:[#allocation5 + $0x8] sm:$0xff]
    %v49 = vmax.f32 %v45, 0.0
    %v50 = vmax.f32 %v46, 0.0
    %v51 = vmul.f32 %v45, %v47
    %v52 = vmul.f32 %v46, %v48
    %v53 = vsub.f32 %v49, %v51
    %v54 = vsub.f32 %v50, %v52
    %v55 = vand.u32 2147483647, %v45
    %v56 = vand.u32 2147483647, %v46
    %v57 = vsub.f32 0.0, %v55
    %v58 = vsub.f32 0.0, %v56
    %v59 = vmul.f32 %v57, 1.442695
    %v60 = vpow.pop %v59
    %v61 = vmul.f32 %v58, 1.442695
    %v62 = vpow.pop %v61
    %v63 = vadd.f32 %v60, 1.0
    %v64 = vlog2.pop %v63
    %v65 = vmul.f32 %v64, 0.6931472
    %v66 = vmul.f32 -0.5, %v60
    %v67 = vadd.f32 %v66, 1.0
    %v68 = vmul.f32 %v67, %v60
    %v69 = vand.u32 2147483647, %v60
    %vm70 = vcmp.lt.f32.partialorder %v69, 0.0004427343
    %v71 = vsel %vm70, %v68, %v65
    %v72 = vadd.f32 %v62, 1.0
    %v73 = vlog2.pop %v72
    %v74 = vmul.f32 %v73, 0.6931472
    %v75 = vmul.f32 -0.5, %v62
    %v76 = vadd.f32 %v75, 1.0
    %v77 = vmul.f32 %v76, %v62
    %v78 = vand.u32 2147483647, %v62
    %vm79 = vcmp.lt.f32.partialorder %v78, 0.0004427343
    %v80 = vsel %vm79, %v77, %v74
    %v81 = vadd.f32 %v53, %v71
    %v82 = vadd.f32 %v54, %v80
    %v83 = vmul.f32 %v81, -2.0
    %v84 = vmul.f32 %v82, -2.0
    %v85 = vmul.f32 %v83, 1.442695
    %v86 = vpow.pop %v85
    %v87 = vmul.f32 %v84, 1.442695
    %v88 = vpow.pop %v87
    %vm89 = vcmp.gt.f32.partialorder %v81, 0.6931472
    %vm90 = vcmp.gt.f32.partialorder %v82, 0.6931472
    %v91 = vsel %vm89, 1.0, 4.0
    %v92 = vsel %vm90, 1.0, 4.0
    %v93 = vmul.f32 %v86, %v91
    %v94 = vmul.f32 %v88, %v92
    %v95 = vmul.f32 %v81, %v93
    %v96 = vmul.f32 %v82, %v94
    %v97 = vld [vmem:[#allocation7] sm:$0x1]
    %v98 = vadd.f32 %v95, %v96
    %v99 = vrot.slane %v98, 4
    %v100 = vadd.f32 %v98, %v99
    %v101 = vrot.slane %v100, 2
    %v102 = vadd.f32 %v100, %v101
    %v103 = vrot.slane %v102, 1
    %v104 = vadd.f32 %v102, %v103
    %v105 = vadd.f32 %v97, %v104
    %106 = vst [vmem:[#allocation7] sm:$0x1] %v105
    // Predicated region
    $region22: #{tpu_custom_call.1} parent=1 // pred_check
      _
    $region23: #{tpu_custom_call.1} parent=1 // pred_check_branch
      %108 = sbr.rel (0) target = $region25
    $region24: #{tpu_custom_call.1} parent=1 // pred_region
      %s110 = ssub.s32 16, 16
      %111 = vsyncadd [#allocation4], %s110
      %s113 = sshll.u32 [#allocation7], 4
      %s114 = int_to_ptr.vmem [resolvable:$true] %s113
      %116 = dma.vmem_to_hbm [thread:$0]  %s114, 16, %s2, [#allocation4]
    $region25: #{tpu_custom_call.1} parent=1 // pred_fallthru
      _
    // Predicated region
    $region26: #{tpu_custom_call.1} parent=1 // pred_check
      _
    $region27: #{tpu_custom_call.1} parent=1 // pred_check_branch
      %118 = sbr.rel (0) target = $region29
    $region28: #{tpu_custom_call.1} parent=1 // pred_region
      %119 = dma.done [#allocation4], 16
    $region29: #{tpu_custom_call.1} parent=1 // pred_fallthru
      _
    %120 = vsyncpa [#allocation3], 1
    %121 = vsyncpa [#allocation6], 1
    %122 = vsyncpa [#allocation4], 1

</llo_original>
